<compile_context>
chip_gen: v6e
topology: v6e:2x2x1
jax: 0.10.0
libtpu: 0.0.40
codegen_flags: <defaults>
</compile_context>

<pallas_src>
import jax
import jax.numpy as jnp
from jax.experimental import pallas as pl
from jax.experimental.pallas import tpu as pltpu

_LANE = 128            # feature dims padded to multiples of the lane width
_VMEM_CAP = 64 << 20   # smallest physical VMEM across v5e/v6e/v7x


def _round_up(x, m):
    return (x + m - 1) // m * m


def _te_mlp_kernel(x_ref, w1_ref, b1_ref, w2_ref, b2_ref, out_ref):
    # linear_1 (cond_proj already folded into x / w1 at prepare time).
    # Native-dtype MXU operands, f32 accumulator.
    h = jnp.dot(x_ref[...], w1_ref[...], preferred_element_type=jnp.float32)
    h = h + b1_ref[...]                       # b1 is already f32
    h = h * jax.nn.sigmoid(h)                 # silu in f32 (EUP; legal on v5e)
    # linear_2 for this out_dim tile; f32 accumulate, cast for native MXU path.
    o = jnp.dot(h.astype(w2_ref.dtype), w2_ref[...],
                preferred_element_type=jnp.float32)
    o = o + b2_ref[...]                       # b2 is already f32
    out_ref[...] = o.astype(out_ref.dtype)


def prepare_timestep_embedding_params(w1, b1, w2, b2, wc=None,
                                      weight_dtype=jnp.bfloat16):
    """One-time weight-load-time preparation (hoisted out of the forward pass).

    w1: [in_channels, time_embed_dim]   b1: [time_embed_dim] or [1, time_embed_dim]
    w2: [time_embed_dim, out_dim]       b2: [out_dim]        or [1, out_dim]
    wc: [cond_proj_dim, in_channels] or None   (cond_proj weight, no bias)
    weight_dtype: dtype for the MXU weight operands (None -> keep w1/w2 dtype).
    """
    in_channels, time_dim = w1.shape
    out_dim = w2.shape[1]
    cond_dim = 0 if wc is None else wc.shape[0]
    wdt = jnp.dtype(weight_dtype) if weight_dtype is not None else jnp.dtype(w1.dtype)

    b1 = jnp.asarray(b1, jnp.float32).reshape(1, time_dim)
    b2 = jnp.asarray(b2, jnp.float32).reshape(1, out_dim)

    if wc is not None:
        # Fold cond_proj into linear_1:  (s + c@Wc)@W1 == [s, c] @ [W1; Wc@W1].
        wc_w1 = jnp.dot(wc.astype(jnp.float32), w1.astype(jnp.float32),
                        preferred_element_type=jnp.float32)
        w1_eff = jnp.concatenate([w1.astype(jnp.float32), wc_w1], axis=0)
    else:
        w1_eff = w1.astype(jnp.float32)

    k = in_channels + cond_dim
    kp = _round_up(k, _LANE)
    tp = _round_up(time_dim, _LANE)
    np_ = _round_up(out_dim, _LANE)

    w1_eff = jnp.pad(w1_eff, ((0, kp - k), (0, tp - time_dim))).astype(wdt)
    b1 = jnp.pad(b1, ((0, 0), (0, tp - time_dim)))
    w2p = jnp.pad(w2.astype(jnp.float32),
                  ((0, tp - time_dim), (0, np_ - out_dim))).astype(wdt)
    b2 = jnp.pad(b2, ((0, 0), (0, np_ - out_dim)))

    return dict(w1=w1_eff, b1=b1, w2=w2p, b2=b2,
                in_channels=in_channels, cond_dim=cond_dim, out_dim=out_dim,
                k=k, kp=kp, tp=tp, np=np_)


def _spec(shape, index_map, single_buffer):
    """BlockSpec, single-buffered when its block index never changes."""
    if single_buffer:
        try:
            return pl.BlockSpec(shape, index_map, pipeline_mode=pl.Buffered(1))
        except (TypeError, AttributeError):
            pass  # jax build without pipeline_mode / Buffered support
    return pl.BlockSpec(shape, index_map)


def timestep_embedding(params, sample, condition=None, *, tile_b=256, tile_n=512):
    """Fused TimestepEmbedding forward using prepared params.

    sample:    [B, in_channels]
    condition: [B, cond_proj_dim] or None (must match how params were prepared)
    returns:   [B, out_dim]
    """
    B = sample.shape[0]
    k, kp, tp, np_p = params["k"], params["kp"], params["tp"], params["np"]
    out_dim = params["out_dim"]
    cond_dim = params["cond_dim"]
    if (condition is None) != (cond_dim == 0):
        raise ValueError("condition presence must match prepared params")

    cdt = params["w1"].dtype
    out_dtype = sample.dtype

    # Per-call activation shaping only (cheap; weight-side prep already hoisted).
    x = sample.astype(cdt)
    if condition is not None:
        x = jnp.concatenate([x, condition.astype(cdt)], axis=-1)

    # Batch tiling.
    if B <= tile_b:
        tb, b_pad = B, B
    else:
        tb = tile_b
        b_pad = _round_up(B, tb)
    pad_rows, pad_cols = b_pad - B, kp - k
    if pad_rows or pad_cols:
        x = jnp.pad(x, ((0, pad_rows), (0, pad_cols)))

    # out_dim tiling: largest lane-multiple divisor of padded out_dim, capped.
    tn = min(_round_up(tile_n, _LANE), np_p)
    while np_p % tn:
        tn -= _LANE

    grid_b, grid_n = b_pad // tb, np_p // tn
    grid = (grid_b, grid_n)

    in_specs = [
        _spec((tb, kp), lambda i, j: (i, 0), grid_b == 1),   # x (streams over i)
        _spec((kp, tp), lambda i, j: (0, 0), True),          # w1 (VMEM-resident)
        _spec((1, tp), lambda i, j: (0, 0), True),           # b1 (VMEM-resident)
        _spec((tp, tn), lambda i, j: (0, j), grid_n == 1),   # w2 (streams over j)
        _spec((1, tn), lambda i, j: (0, j), grid_n == 1),    # b2
    ]
    out_spec = pl.BlockSpec((tb, tn), lambda i, j: (i, j))

    itemw = cdt.itemsize
    itemo = jnp.dtype(out_dtype).itemsize
    # Conservative VMEM budget: <=2 buffers per block + f32 intermediates + slack.
    est = (2 * tb * kp * itemw
           + 2 * kp * tp * itemw + 2 * tp * 4
           + 2 * tp * tn * itemw + 2 * tn * 4
           + 2 * tb * tn * itemo
           + tb * tp * (4 + itemw) + tb * tn * 4
           + (4 << 20))
    vmem_limit = int(min(_VMEM_CAP, max(est, 32 << 20)))

    flops = 2 * b_pad * (kp * tp * grid_n + tp * np_p)
    bytes_accessed = (b_pad * kp * itemw
                      + params["w1"].size * itemw + params["b1"].size * 4
                      + params["w2"].size * itemw + params["b2"].size * 4
                      + b_pad * np_p * itemo)
    cost = pl.CostEstimate(flops=int(flops),
                           transcendentals=int(b_pad * tp * grid_n),
                           bytes_accessed=int(bytes_accessed))

    out = pl.pallas_call(
        _te_mlp_kernel,
        out_shape=jax.ShapeDtypeStruct((b_pad, np_p), out_dtype),
        grid=grid,
        in_specs=in_specs,
        out_specs=out_spec,
        compiler_params=pltpu.CompilerParams(
            dimension_semantics=("parallel", "parallel"),
            vmem_limit_bytes=vmem_limit),
        cost_estimate=cost,
    )(x, params["w1"], params["b1"], params["w2"], params["b2"])

    if b_pad != B or np_p != out_dim:
        out = out[:B, :out_dim]
    return out


def _reference(sample, w1, b1, w2, b2, condition=None, wc=None):
    # Exact PyTorch-module order of operations, in f32.
    s = sample.astype(jnp.float32)
    if condition is not None:
        s = s + condition.astype(jnp.float32) @ wc.astype(jnp.float32)
    h = s @ w1.astype(jnp.float32) + b1.astype(jnp.float32).reshape(1, -1)
    h = h * jax.nn.sigmoid(h)
    o = h @ w2.astype(jnp.float32) + b2.astype(jnp.float32).reshape(1, -1)
    return o.astype(sample.dtype)


if __name__ == "__main__":
    # Small, module-consistent shapes.
    B = 16
    in_channels = 32
    time_embed_dim = 64
    out_dim = 64            # out_dim=None -> time_embed_dim; explicit here
    cond_proj_dim = 16

    key = jax.random.PRNGKey(0)
    ks = jax.random.split(key, 7)
    dtype = jnp.float32

    sample = jax.random.normal(ks[0], (B, in_channels), dtype)
    condition = jax.random.normal(ks[1], (B, cond_proj_dim), dtype)

    # Synthetic parameters stored as [in, out]; biases as [1, out].
    wc = jax.random.normal(ks[2], (cond_proj_dim, in_channels), dtype) * 0.05
    w1 = jax.random.normal(ks[3], (in_channels, time_embed_dim), dtype) * 0.05
    b1 = jax.random.normal(ks[4], (1, time_embed_dim), dtype) * 0.05
    w2 = jax.random.normal(ks[5], (time_embed_dim, out_dim), dtype) * 0.05
    b2 = jax.random.normal(ks[6], (1, out_dim), dtype) * 0.05

    # Path 1: cond_proj, native f32 weights, tile_b=8 -> grid (2, 1): exercises
    # batch streaming against single-buffered VMEM-resident weights.
    p_f32 = prepare_timestep_embedding_params(w1, b1, w2, b2, wc, weight_dtype=None)
    out = jax.block_until_ready(timestep_embedding(p_f32, sample, condition, tile_b=8))
    ref = _reference(sample, w1, b1, w2, b2, condition, wc)
    assert out.shape == (B, out_dim)
    assert jnp.allclose(out, ref, atol=1e-4, rtol=1e-4)

    # Path 2: no cond_proj, batch not a multiple of the tile (pad + slice).
    p_nc = prepare_timestep_embedding_params(w1, b1, w2, b2, None, weight_dtype=None)
    out2 = jax.block_until_ready(timestep_embedding(p_nc, sample[:13], tile_b=8))
    ref2 = _reference(sample[:13], w1, b1, w2, b2)
    assert out2.shape == (13, out_dim)
    assert jnp.allclose(out2, ref2, atol=1e-4, rtol=1e-4)

    # Path 3: production-style bf16 weights (default), default tiles -> grid (1, 1),
    # fully VMEM-resident single-buffered operands; loose tolerance vs f32 reference.
    p_bf16 = prepare_timestep_embedding_params(w1, b1, w2, b2, wc)
    out3 = jax.block_until_ready(timestep_embedding(p_bf16, sample, condition))
    assert out3.shape == (B, out_dim)
    assert jnp.allclose(out3, ref, atol=2e-2, rtol=2e-2)

    print("KERNEL_OK")
</pallas_src>

<mosaic_0001>
module attributes {stable_mosaic.version = 11 : i64} {
  func.func @_te_mlp_kernel(%arg0: i32, %arg1: i32, %arg2: memref<8x128xf32, #tpu.memory_space<vmem>>, %arg3: memref<128x128xf32, #tpu.memory_space<vmem>>, %arg4: memref<1x128xf32, #tpu.memory_space<vmem>>, %arg5: memref<128x128xf32, #tpu.memory_space<vmem>>, %arg6: memref<1x128xf32, #tpu.memory_space<vmem>>, %arg7: memref<8x128xf32, #tpu.memory_space<vmem>>) attributes {dimension_semantics = [#tpu.dimension_semantics<parallel>, #tpu.dimension_semantics<parallel>], iteration_bounds = array<i64: 2, 1>, scalar_prefetch = 0 : i64, scratch_operands = 0 : i64, tpu.core_type = #tpu.core_type<tc>, window_params = [{transform_indices = @transform_0, window_bounds = array<i64: 8, 128>}, {pipeline_mode = #tpu.pipeline_mode<synchronous>, transform_indices = @transform_1, window_bounds = array<i64: 128, 128>}, {pipeline_mode = #tpu.pipeline_mode<synchronous>, transform_indices = @transform_2, window_bounds = array<i64: 1, 128>}, {pipeline_mode = #tpu.pipeline_mode<synchronous>, transform_indices = @transform_3, window_bounds = array<i64: 128, 128>}, {pipeline_mode = #tpu.pipeline_mode<synchronous>, transform_indices = @transform_4, window_bounds = array<i64: 1, 128>}, {transform_indices = @transform_5, window_bounds = array<i64: 8, 128>}]} {
    %c0 = arith.constant 0 : index
    %c0_0 = arith.constant 0 : index
    %0 = vector.load %arg2[%c0, %c0_0] : memref<8x128xf32, #tpu.memory_space<vmem>>, vector<8x128xf32>
    %c0_1 = arith.constant 0 : index
    %c0_2 = arith.constant 0 : index
    %1 = vector.load %arg3[%c0_1, %c0_2] : memref<128x128xf32, #tpu.memory_space<vmem>>, vector<128x128xf32>
    %cst = arith.constant dense<0.000000e+00> : vector<8x128xf32>
    %2 = tpu.matmul %0, %1, %cst {dimension_numbers = #tpu.dot_dimension_numbers<[1], [0], [0], [1], [0, 0, 1, 1], [], []>} : vector<8x128xf32>, vector<128x128xf32>, vector<8x128xf32> -> vector<8x128xf32>
    %c0_3 = arith.constant 0 : index
    %c0_4 = arith.constant 0 : index
    %3 = vector.load %arg4[%c0_3, %c0_4] : memref<1x128xf32, #tpu.memory_space<vmem>>, vector<1x128xf32>
    %4 = vector.broadcast %3 : vector<1x128xf32> to vector<8x128xf32>
    %5 = arith.addf %2, %4 : vector<8x128xf32>
    %6 = arith.negf %5 : vector<8x128xf32>
    %7 = math.exp %6 : vector<8x128xf32>
    %cst_5 = arith.constant 1.000000e+00 : f32
    %8 = vector.broadcast %cst_5 : f32 to vector<8x128xf32>
    %9 = arith.addf %8, %7 : vector<8x128xf32>
    %10 = arith.divf %8, %9 : vector<8x128xf32>
    %11 = arith.mulf %5, %10 : vector<8x128xf32>
    %c0_6 = arith.constant 0 : index
    %c0_7 = arith.constant 0 : index
    %12 = vector.load %arg5[%c0_6, %c0_7] : memref<128x128xf32, #tpu.memory_space<vmem>>, vector<128x128xf32>
    %cst_8 = arith.constant dense<0.000000e+00> : vector<8x128xf32>
    %13 = tpu.matmul %11, %12, %cst_8 {dimension_numbers = #tpu.dot_dimension_numbers<[1], [0], [0], [1], [0, 0, 1, 1], [], []>} : vector<8x128xf32>, vector<128x128xf32>, vector<8x128xf32> -> vector<8x128xf32>
    %c0_9 = arith.constant 0 : index
    %c0_10 = arith.constant 0 : index
    %14 = vector.load %arg6[%c0_9, %c0_10] : memref<1x128xf32, #tpu.memory_space<vmem>>, vector<1x128xf32>
    %15 = vector.broadcast %14 : vector<1x128xf32> to vector<8x128xf32>
    %16 = arith.addf %13, %15 : vector<8x128xf32>
    %c0_11 = arith.constant 0 : index
    %c0_12 = arith.constant 0 : index
    %17 = vector.load %arg7[%c0_11, %c0_12] : memref<8x128xf32, #tpu.memory_space<vmem>>, vector<8x128xf32>
    tpu.vector_store %arg7[%c0_11, %c0_12], %16 {strides = array<i32>} : memref<8x128xf32, #tpu.memory_space<vmem>>, vector<8x128xf32>,
    return
  }
  func.func @transform_0(%arg0: i32, %arg1: i32) -> (i32, i32) {
    %c0_i32 = arith.constant 0 : i32
    %c0_i32_0 = arith.constant 0 : i32
    return %arg0, %c0_i32 : i32, i32
  }
  func.func @transform_1(%arg0: i32, %arg1: i32) -> (i32, i32) {
    %c0_i32 = arith.constant 0 : i32
    %c0_i32_0 = arith.constant 0 : i32
    %c0_i32_1 = arith.constant 0 : i32
    return %c0_i32, %c0_i32_0 : i32, i32
  }
  func.func @transform_2(%arg0: i32, %arg1: i32) -> (i32, i32) {
    %c0_i32 = arith.constant 0 : i32
    %c0_i32_0 = arith.constant 0 : i32
    %c0_i32_1 = arith.constant 0 : i32
    return %c0_i32, %c0_i32_0 : i32, i32
  }
  func.func @transform_3(%arg0: i32, %arg1: i32) -> (i32, i32) {
    %c0_i32 = arith.constant 0 : i32
    %c0_i32_0 = arith.constant 0 : i32
    return %c0_i32, %arg1 : i32, i32
  }
  func.func @transform_4(%arg0: i32, %arg1: i32) -> (i32, i32) {
    %c0_i32 = arith.constant 0 : i32
    %c0_i32_0 = arith.constant 0 : i32
    return %c0_i32, %arg1 : i32, i32
  }
  func.func @transform_5(%arg0: i32, %arg1: i32) -> (i32, i32) {
    %c0_i32 = arith.constant 0 : i32
    return %arg0, %arg1 : i32, i32
  }
}

</mosaic_0001>

<llo_original>
// kernel: tpu_custom_call.1
$region0: #{tpu_custom_call.1}
  #allocation0 [shape = 'u32[]', space=smem, size = 0x4, offset = 0x4, fixed_abs, tag = 'smem constant byte address 0x4 - core index']
  #allocation1 [shape = 'u32[144,128]{1,0:T(1,128)}', space=vmem, size = 0x12000, scoped, tag = 'internal scratch']
  %s0 = inlined_call_operand.hbm [shape: f32[16,128], index: 0, kind: input, shape index: {}]
  %s1 = inlined_call_operand.hbm [shape: f32[128,128], index: 1, kind: input, shape index: {}]
  %s2 = inlined_call_operand.vmem [shape: f32[1,128], index: 2, kind: input, shape index: {}]
  %s3 = inlined_call_operand.hbm [shape: f32[128,128], index: 3, kind: input, shape index: {}]
  %s4 = inlined_call_operand.vmem [shape: f32[1,128], index: 4, kind: input, shape index: {}]
  %s5 = inlined_call_operand.hbm [shape: f32[16,128], index: 5, kind: output, shape index: {}]
  %s6 = sld [smem:[#allocation0]]
  $region65: #{tpu_custom_call.1} parent=0
    _
  %s8 = ssub.s32 1, %s6
  %s9 = scalar_select 0, %s8, %s6
  $region1: #{tpu_custom_call.1} parent=0
    #allocation2 [shape = 'u8[8192]{0}', space=vmem, size = 0x2000, scoped, tag = 'input window, operand 0']
    #allocation3 [shape = 's32[2]{0}', space=sflag, size = 0x8, scoped, tag = 'scoped memory for tpu_custom_call.1']
    #allocation4 [shape = 's32[2]{0}', space=sflag, size = 0x8, scoped, tag = 'scoped memory for tpu_custom_call.1']
    #allocation5 [shape = 'u8[65536]{0}', space=vmem, size = 0x10000, scoped, tag = 'input window, operand 1, single buffered']
    #allocation6 [shape = 's32[1]{0}', space=sflag, size = 0x4, scoped, tag = 'scoped memory for tpu_custom_call.1']
    #allocation7 [shape = 'u8[65536]{0}', space=vmem, size = 0x10000, scoped, tag = 'input window, operand 3, single buffered']
    #allocation8 [shape = 'u8[8192]{0}', space=vmem, size = 0x2000, scoped, tag = 'output window, operand 0']
    %10 = vsyncpa [#allocation3], 0
    %s11 = scalar_lea.sflag [#allocation3], 1
    %12 = vsyncpa %s11, 0
    %13 = vsyncpa [#allocation6], 0
    %14 = vsyncpa [#allocation4], 0
    %s15 = scalar_lea.sflag [#allocation4], 1
    %16 = vsyncpa %s15, 0
    loop: start=0, step=1, limit=4
    $region2: #{tpu_custom_call.1} parent=1 // loop_pre_header
      _
    $region3: #{tpu_custom_call.1} parent=1 // loop_header
      %s18 = sphi 0, %s22
      %p19 = scmp.ge.s32.totalorder %s18, 4
      %s25 = sphi 0, %s37
      %s26 = sphi 0, %s33
      %s27 = sphi 0, %s25
      %s28 = sphi 0, %s26
      %s29 = sphi 0, %s27
      %s30 = sphi 0, %s28
      %s40 = sphi 0, %s42
      %s43 = sphi 0, %s40
      %s44 = sphi 0, %s43
      %s60 = sphi 0, %s44
      %s64 = sphi 0, %s64
      %s66 = sphi 0, %s64
      %s67 = sphi 0, %s66
      %s81 = sphi 0, %s67
      %s85 = sphi 0, %s85
      %s87 = sphi 0, %s85
      %s88 = sphi 0, %s87
      %s102 = sphi 0, %s88
      %s108 = sphi 0, %s110
      %s111 = sphi 0, %s108
      %s112 = sphi 0, %s111
      %s128 = sphi 0, %s112
      %s134 = sphi 0, %s136
      %s137 = sphi 0, %s134
      %s138 = sphi 0, %s137
      %s154 = sphi 0, %s138
      %s162 = sphi 0, %s164
      %s165 = sphi 0, %s162
      %s166 = sphi 0, %s165
      %s182 = sphi 0, %s166
    $region4: #{tpu_custom_call.1} parent=1 // loop_header_branch
      %21 = sbr.rel (%p19) target = $region8
    $region5: #{tpu_custom_call.1} parent=1 // loop_body
      %s23 = ssub.s32 %s18, 1
      %s24 = ssub.s32 %s18, 2
      %s31 = sadd.s32 1, %s26
      %p32 = scmp.ge.s32.totalorder %s31, 1
      %s33 = scalar_select %p32, 0, %s31
      %s34 = sadd.s32 1, %s25
      %s35 = scalar_select %p32, %s34, %s25
      %p36 = scmp.ge.s32.totalorder %s35, 2
      %s37 = scalar_select %p36, 0, %s35
      %s38 = ssub.s32 %s25, %s37
      %p39 = scmp.eq.s32.totalorder %s38, 0
      %s41 = sadd.s32 %s40, 1
      %s42 = scalar_select %p39, %s40, %s41
      %p45 = pneg %p39
      %p46 = scmp.eq.s32.totalorder %s18, 1
      %p47 = por %p45, %p46
      %p48 = scmp.ne.s32.totalorder %s40, %s43
      %p49 = scmp.eq.s32.totalorder %s18, 0
      %p50 = por %p48, %p49
      %p51 = scmp.ne.s32.totalorder %s40, %s43
      %p52 = scmp.eq.s32.totalorder %s23, 1
      %p53 = por %p51, %p52
      %p54 = scmp.ne.s32.totalorder %s43, %s44
      %p55 = scmp.eq.s32.totalorder %s23, 0
      %p56 = por %p54, %p55
      %p57 = scmp.ne.s32.totalorder %s43, %s44
      %p58 = scmp.eq.s32.totalorder %s24, 1
      %p59 = por %p57, %p58
      %p61 = scmp.ne.s32.totalorder %s44, %s60
      %p62 = scmp.eq.s32.totalorder %s24, 0
      %p63 = por %p61, %p62
      %s65 = sadd.s32 %s64, 1
      %p68 = scmp.eq.s32.totalorder %s18, 1
      %p69 = scmp.ne.s32.totalorder %s64, %s66
      %p70 = scmp.eq.s32.totalorder %s18, 0
      %p71 = por %p69, %p70
      %p72 = scmp.ne.s32.totalorder %s64, %s66
      %p73 = scmp.eq.s32.totalorder %s23, 1
      %p74 = por %p72, %p73
      %p75 = scmp.ne.s32.totalorder %s66, %s67
      %p76 = scmp.eq.s32.totalorder %s23, 0
      %p77 = por %p75, %p76
      %p78 = scmp.ne.s32.totalorder %s66, %s67
      %p79 = scmp.eq.s32.totalorder %s24, 1
      %p80 = por %p78, %p79
      %p82 = scmp.ne.s32.totalorder %s67, %s81
      %p83 = scmp.eq.s32.totalorder %s24, 0
      %p84 = por %p82, %p83
      %s86 = sadd.s32 %s85, 1
      %p89 = scmp.eq.s32.totalorder %s18, 1
      %p90 = scmp.ne.s32.totalorder %s85, %s87
      %p91 = scmp.eq.s32.totalorder %s18, 0
      %p92 = por %p90, %p91
      %p93 = scmp.ne.s32.totalorder %s85, %s87
      %p94 = scmp.eq.s32.totalorder %s23, 1
      %p95 = por %p93, %p94
      %p96 = scmp.ne.s32.totalorder %s87, %s88
      %p97 = scmp.eq.s32.totalorder %s23, 0
      %p98 = por %p96, %p97
      %p99 = scmp.ne.s32.totalorder %s87, %s88
      %p100 = scmp.eq.s32.totalorder %s24, 1
      %p101 = por %p99, %p100
      %p103 = scmp.ne.s32.totalorder %s88, %s102
      %p104 = scmp.eq.s32.totalorder %s24, 0
      %p105 = por %p103, %p104
      %s106 = ssub.s32 %s26, %s33
      %p107 = scmp.eq.s32.totalorder %s106, 0
      %s109 = sadd.s32 %s108, 1
      %s110 = scalar_select %p107, %s108, %s109
      %p113 = pneg %p107
      %p114 = scmp.eq.s32.totalorder %s18, 1
      %p115 = por %p113, %p114
      %p116 = scmp.ne.s32.totalorder %s108, %s111
      %p117 = scmp.eq.s32.totalorder %s18, 0
      %p118 = por %p116, %p117
      %p119 = scmp.ne.s32.totalorder %s108, %s111
      %p120 = scmp.eq.s32.totalorder %s23, 1
      %p121 = por %p119, %p120
      %p122 = scmp.ne.s32.totalorder %s111, %s112
      %p123 = scmp.eq.s32.totalorder %s23, 0
      %p124 = por %p122, %p123
      %p125 = scmp.ne.s32.totalorder %s111, %s112
      %p126 = scmp.eq.s32.totalorder %s24, 1
      %p127 = por %p125, %p126
      %p129 = scmp.ne.s32.totalorder %s112, %s128
      %p130 = scmp.eq.s32.totalorder %s24, 0
      %p131 = por %p129, %p130
      %s132 = ssub.s32 %s26, %s33
      %p133 = scmp.eq.s32.totalorder %s132, 0
      %s135 = sadd.s32 %s134, 1
      %s136 = scalar_select %p133, %s134, %s135
      %p139 = pneg %p133
      %p140 = scmp.eq.s32.totalorder %s18, 1
      %p141 = por %p139, %p140
      %p142 = scmp.ne.s32.totalorder %s134, %s137
      %p143 = scmp.eq.s32.totalorder %s18, 0
      %p144 = por %p142, %p143
      %p145 = scmp.ne.s32.totalorder %s134, %s137
      %p146 = scmp.eq.s32.totalorder %s23, 1
      %p147 = por %p145, %p146
      %p148 = scmp.ne.s32.totalorder %s137, %s138
      %p149 = scmp.eq.s32.totalorder %s23, 0
      %p150 = por %p148, %p149
      %p151 = scmp.ne.s32.totalorder %s137, %s138
      %p152 = scmp.eq.s32.totalorder %s24, 1
      %p153 = por %p151, %p152
      %p155 = scmp.ne.s32.totalorder %s138, %s154
      %p156 = scmp.eq.s32.totalorder %s24, 0
      %p157 = por %p155, %p156
      %s158 = ssub.s32 %s25, %s37
      %s159 = ssub.s32 %s26, %s33
      %s160 = sor.u32 %s158, %s159
      %p161 = scmp.eq.s32.totalorder %s160, 0
      %s163 = sadd.s32 %s162, 1
      %s164 = scalar_select %p161, %s162, %s163
      %p167 = pneg %p161
      %p168 = scmp.eq.s32.totalorder %s18, 1
      %p169 = por %p167, %p168
      %p170 = scmp.ne.s32.totalorder %s162, %s165
      %p171 = scmp.eq.s32.totalorder %s18, 0
      %p172 = por %p170, %p171
      %p173 = scmp.ne.s32.totalorder %s162, %s165
      %p174 = scmp.eq.s32.totalorder %s23, 1
      %p175 = por %p173, %p174
      %p176 = scmp.ne.s32.totalorder %s165, %s166
      %p177 = scmp.eq.s32.totalorder %s23, 0
      %p178 = por %p176, %p177
      %p179 = scmp.ne.s32.totalorder %s165, %s166
      %p180 = scmp.eq.s32.totalorder %s24, 1
      %p181 = por %p179, %p180
      %p183 = scmp.ne.s32.totalorder %s166, %s182
      %p184 = scmp.eq.s32.totalorder %s24, 0
      %p185 = por %p183, %p184
      %p186 = scmp.le.s32.totalorder 1, %s18
      %p187 = scmp.lt.s32.totalorder %s18, 3
      %p188 = pnand %p186, %p187
      %p189 = pneg %p188
      // Predicated region
      $region9: #{tpu_custom_call.1} parent=5 // pred_check
        _
      $region10: #{tpu_custom_call.1} parent=5 // pred_check_branch
        %191 = sbr.rel (%p188) target = $region12
      $region11: #{tpu_custom_call.1} parent=5 // pred_region
        %s192 = ssub.s32 %s18, 1
        // Predicated region
        $region13: #{tpu_custom_call.1} parent=11 // pred_check
          %p193 = pneg %p77
        $region14: #{tpu_custom_call.1} parent=11 // pred_check_branch
          %195 = sbr.rel (%p193) target = $region16
        $region15: #{tpu_custom_call.1} parent=11 // pred_region
          %s197 = ssub.s32 2048, 2048
          %198 = vsyncadd [#allocation6], %s197
          %s199 = sshll.u32 [#allocation5], 4
          %s200 = int_to_ptr.vmem [resolvable:$true] %s199
          %205 = dma.hbm_to_vmem [thread:$0]  %s1, 2048, %s200, [#allocation6], 128, 128, 8
        $region16: #{tpu_custom_call.1} parent=11 // pred_fallthru
          _
        // Predicated region
        $region17: #{tpu_custom_call.1} parent=11 // pred_check
          %p206 = pneg %p98
        $region18: #{tpu_custom_call.1} parent=11 // pred_check_branch
          %208 = sbr.rel (%p206) target = $region20
        $region19: #{tpu_custom_call.1} parent=11 // pred_region
          _
        $region20: #{tpu_custom_call.1} parent=11 // pred_fallthru
          _
        // Predicated region
        $region21: #{tpu_custom_call.1} parent=11 // pred_check
          %p209 = pneg %p124
        $region22: #{tpu_custom_call.1} parent=11 // pred_check_branch
          %211 = sbr.rel (%p209) target = $region24
        $region23: #{tpu_custom_call.1} parent=11 // pred_region
          %s213 = ssub.s32 2048, 2048
          %214 = vsyncadd [#allocation6], %s213
          %s215 = smul.addr %s28, 128
          %s216 = scalar_lea.hbm %s3, %s215
          %s217 = sshll.u32 [#allocation7], 4
          %s218 = int_to_ptr.vmem [resolvable:$true] %s217
          %223 = dma.hbm_to_vmem [thread:$0]  %s216, 2048, %s218, [#allocation6], 128, 128, 8
        $region24: #{tpu_custom_call.1} parent=11 // pred_fallthru
          _
        // Predicated region
        $region25: #{tpu_custom_call.1} parent=11 // pred_check
          %p224 = pneg %p150
        $region26: #{tpu_custom_call.1} parent=11 // pred_check_branch
          %226 = sbr.rel (%p224) target = $region28
        $region27: #{tpu_custom_call.1} parent=11 // pred_region
          %p227 = scmp.lt.s32.totalorder %s28, 0
          %s228 = scalar_select %p227, %s28, 0
          %s229 = scalar_lea.vmem %s4, %s228
        $region28: #{tpu_custom_call.1} parent=11 // pred_fallthru
          _
      $region12: #{tpu_custom_call.1} parent=5 // pred_fallthru
        _
      %p230 = scmp.lt.s32.totalorder %s18, 2
      // Predicated region
      $region29: #{tpu_custom_call.1} parent=5 // pred_check
        %p231 = pneg %p230
      $region30: #{tpu_custom_call.1} parent=5 // pred_check_branch
        %233 = sbr.rel (%p231) target = $region32
      $region31: #{tpu_custom_call.1} parent=5 // pred_region
        // Predicated region
        $region33: #{tpu_custom_call.1} parent=31 // pred_check
          %p234 = pneg %p50
        $region34: #{tpu_custom_call.1} parent=31 // pred_check_branch
          %236 = sbr.rel (%p234) target = $region36
        $region35: #{tpu_custom_call.1} parent=31 // pred_region
          %s237 = sand.u32 %s40, 1
          %s238 = scalar_lea.sflag [#allocation3], %s237
          %s239 = sand.u32 %s40, 1
          %s240 = smul.addr %s239, 8
          %s241 = scalar_lea.vmem [#allocation2], %s240
          %s243 = ssub.s32 128, 128
          %244 = vsyncadd %s238, %s243
          %s245 = smul.addr %s25, 128
          %s246 = scalar_lea.hbm %s0, %s245
          %s248 = sshll.u32 %s241, 4
          %s249 = int_to_ptr.vmem [resolvable:$true] %s248
          %251 = dma.hbm_to_vmem [thread:$0]  %s246, 128, %s249, %s238
        $region36: #{tpu_custom_call.1} parent=31 // pred_fallthru
          _
      $region32: #{tpu_custom_call.1} parent=5 // pred_fallthru
        _
      %p252 = scmp.le.s32.totalorder 1, %s18
      %p253 = scmp.lt.s32.totalorder %s18, 3
      %p254 = pnand %p252, %p253
      %p255 = pneg %p254
      // Predicated region
      $region37: #{tpu_custom_call.1} parent=5 // pred_check
        _
      $region38: #{tpu_custom_call.1} parent=5 // pred_check_branch
        %257 = sbr.rel (%p254) target = $region40
      $region39: #{tpu_custom_call.1} parent=5 // pred_region
        %s258 = ssub.s32 %s18, 1
        %s259 = sand.u32 %s43, 1
        %s260 = scalar_lea.sflag [#allocation3], %s259
        %s261 = sand.u32 %s43, 1
        %s262 = smul.addr %s261, 8
        %s263 = scalar_lea.vmem [#allocation2], %s262
        // Predicated region
        $region41: #{tpu_custom_call.1} parent=39 // pred_check
          %p264 = pneg %p56
        $region42: #{tpu_custom_call.1} parent=39 // pred_check_branch
          %266 = sbr.rel (%p264) target = $region44
        $region43: #{tpu_custom_call.1} parent=39 // pred_region
          %267 = dma.done %s260, 128
        $region44: #{tpu_custom_call.1} parent=39 // pred_fallthru
          _
        // Predicated region
        $region45: #{tpu_custom_call.1} parent=39 // pred_check
          %p268 = pneg %p77
        $region46: #{tpu_custom_call.1} parent=39 // pred_check_branch
          %270 = sbr.rel (%p268) target = $region48
        $region47: #{tpu_custom_call.1} parent=39 // pred_region
          %271 = dma.done [#allocation6], 2048
        $region48: #{tpu_custom_call.1} parent=39 // pred_fallthru
          _
        // Predicated region
        $region49: #{tpu_custom_call.1} parent=39 // pred_check
          %p272 = pneg %p124
        $region50: #{tpu_custom_call.1} parent=39 // pred_check_branch
          %274 = sbr.rel (%p272) target = $region52
        $region51: #{tpu_custom_call.1} parent=39 // pred_region
          %275 = dma.done [#allocation6], 2048
        $region52: #{tpu_custom_call.1} parent=39 // pred_fallthru
          _
        %s276 = sand.u32 %s43, 1
        %s277 = scalar_lea.sflag [#allocation3], %s276
        %s278 = sand.u32 %s43, 1
        %s279 = smul.addr %s278, 8
        %s280 = scalar_lea.vmem [#allocation2], %s279
        %p281 = pneg %p56
        %p282 = pneg %p53
        %p283 = pneg %p77
        %p284 = pneg %p74
        %p285 = pneg %p98
        %p286 = pneg %p95
        %p287 = pneg %p124
        %p288 = pneg %p121
        %p289 = scmp.lt.s32.totalorder %s28, 0
        %s290 = scalar_select %p289, %s28, 0
        %s291 = scalar_lea.vmem %s4, %s290
        %p292 = pneg %p150
        %p293 = pneg %p147
        %p294 = pneg %p178
        %p295 = pneg %p175
        %s296 = sand.u32 %s165, 1
        %s297 = scalar_lea.sflag [#allocation4], %s296
        %s298 = sand.u32 %s165, 1
        %s299 = smul.addr %s298, 8
        %s300 = scalar_lea.vmem [#allocation8], %s299
        %p301 = scmp.lt.s32.totalorder %s28, 0
        %s302 = scalar_select %p301, %s28, 0
        %s303 = scalar_lea.vmem %s4, %s302
        %v304 = vld [vmem:[%s263] sm:$0xff]
        %v305 = vld [vmem:[#allocation5] sm:$0xff]
        %v306 = vld [vmem:[#allocation5 + $0x8] sm:$0xff]
        %v307 = vld [vmem:[#allocation5 + $0x10] sm:$0xff]
        %v308 = vld [vmem:[#allocation5 + $0x18] sm:$0xff]
        %v309 = vld [vmem:[#allocation5 + $0x20] sm:$0xff]
        %v310 = vld [vmem:[#allocation5 + $0x28] sm:$0xff]
        %v311 = vld [vmem:[#allocation5 + $0x30] sm:$0xff]
        %v312 = vld [vmem:[#allocation5 + $0x38] sm:$0xff]
        %v313 = vld [vmem:[#allocation5 + $0x40] sm:$0xff]
        %v314 = vld [vmem:[#allocation5 + $0x48] sm:$0xff]
        %v315 = vld [vmem:[#allocation5 + $0x50] sm:$0xff]
        %v316 = vld [vmem:[#allocation5 + $0x58] sm:$0xff]
        %v317 = vld [vmem:[#allocation5 + $0x60] sm:$0xff]
        %v318 = vld [vmem:[#allocation5 + $0x68] sm:$0xff]
        %v319 = vld [vmem:[#allocation5 + $0x70] sm:$0xff]
        %v320 = vld [vmem:[#allocation5 + $0x78] sm:$0xff]
        %v321 = vld [vmem:[%s2] sm:$0x1]
        %v323 = vlaneseq
        %v324 = vshrl.u32 %v323, 7
        %v325 = vsub.s32 0, %v324
        %v326 = vrot.slane %v321, %v325
        %328 = vmatprep.subr.mxu0 0.0
        %329 = vmatpush1.msra.mxu0 %v320
        %330 = vmatprep.subr.mxu0 0.0
        %331 = vmatpush1.msra.mxu0 %v319
        %332 = vmatprep.subr.mxu0 0.0
        %333 = vmatpush1.msra.mxu0 %v318
        %334 = vmatprep.subr.mxu0 0.0
        %335 = vmatpush1.msra.mxu0 %v317
        %336 = vmatprep.subr.mxu0 0.0
        %337 = vmatpush1.msra.mxu0 %v316
        %338 = vmatprep.subr.mxu0 0.0
        %339 = vmatpush1.msra.mxu0 %v315
        %340 = vmatprep.subr.mxu0 0.0
        %341 = vmatpush1.msra.mxu0 %v314
        %342 = vmatprep.subr.mxu0 0.0
        %343 = vmatpush1.msra.mxu0 %v313
        %344 = vmatprep.subr.mxu0 0.0
        %345 = vmatpush1.msra.mxu0 %v312
        %346 = vmatprep.subr.mxu0 0.0
        %347 = vmatpush1.msra.mxu0 %v311
        %348 = vmatprep.subr.mxu0 0.0
        %349 = vmatpush1.msra.mxu0 %v310
        %350 = vmatprep.subr.mxu0 0.0
        %351 = vmatpush1.msra.mxu0 %v309
        %352 = vmatprep.subr.mxu0 0.0
        %353 = vmatpush1.msra.mxu0 %v308
        %354 = vmatprep.subr.mxu0 0.0
        %355 = vmatpush1.msra.mxu0 %v307
        %356 = vmatprep.subr.mxu0 0.0
        %357 = vmatpush1.msra.mxu0 %v306
        %358 = vmatprep.subr.mxu0 0.0
        %359 = vmatpush1.msra.mxu0 %v305
        %360 = vmatprep.subr.mxu0 0.0
        %361 = vmatpush2.msra.mxu0 0.0
        %362 = vmatprep.subr.mxu0 0.0
        %363 = vmatpush2.msra.mxu0 0.0
        %364 = vmatprep.subr.mxu0 0.0
        %365 = vmatpush2.msra.mxu0 0.0
        %366 = vmatprep.subr.mxu0 0.0
        %367 = vmatpush2.msra.mxu0 0.0
        %368 = vmatprep.subr.mxu0 0.0
        %369 = vmatpush2.msra.mxu0 0.0
        %370 = vmatprep.subr.mxu0 0.0
        %371 = vmatpush2.msra.mxu0 0.0
        %372 = vmatprep.subr.mxu0 0.0
        %373 = vmatpush2.msra.mxu0 0.0
        %374 = vmatprep.subr.mxu0 0.0
        %375 = vmatpush2.msra.mxu0 0.0
        %376 = vmatprep.subr.mxu0 0.0
        %377 = vmatpush2.msra.mxu0 0.0
        %378 = vmatprep.subr.mxu0 0.0
        %379 = vmatpush2.msra.mxu0 0.0
        %380 = vmatprep.subr.mxu0 0.0
        %381 = vmatpush2.msra.mxu0 0.0
        %382 = vmatprep.subr.mxu0 0.0
        %383 = vmatpush2.msra.mxu0 0.0
        %384 = vmatprep.subr.mxu0 0.0
        %385 = vmatpush2.msra.mxu0 0.0
        %386 = vmatprep.subr.mxu0 0.0
        %387 = vmatpush2.msra.mxu0 0.0
        %388 = vmatprep.subr.mxu0 0.0
        %389 = vmatpush2.msra.mxu0 0.0
        %390 = vmatprep.subr.mxu0 0.0
        %391 = vmatpush2.msra.mxu0 0.0
        %392 = vmatprep.mubr.f32.mxu0 0.0
        %393 = vmatmul.mubr.f32.gmra.mxu0 %v304
        %v394 = vpop.f32.mrf.mxu0
        %v395 = vadd.f32 %v326, %v394
        %v396 = vpop.f32.mrf.mxu0
        %397 = vdwg.mxu0
        %v398 = vxor.u32 %v395, 2147483648
        %v399 = vmul.f32 %v398, 1.442695
        %v400 = vpow.pop %v399
        %v401 = vadd.f32 %v400, 1.0
        %v402 = vrcp.pop %v401
        %v403 = vmul.f32 1.0, %v402
        %v404 = vmul.f32 %v395, %v403
        %v405 = vld [vmem:[#allocation7] sm:$0xff]
        %v406 = vld [vmem:[#allocation7 + $0x8] sm:$0xff]
        %v407 = vld [vmem:[#allocation7 + $0x10] sm:$0xff]
        %v408 = vld [vmem:[#allocation7 + $0x18] sm:$0xff]
        %v409 = vld [vmem:[#allocation7 + $0x20] sm:$0xff]
        %v410 = vld [vmem:[#allocation7 + $0x28] sm:$0xff]
        %v411 = vld [vmem:[#allocation7 + $0x30] sm:$0xff]
        %v412 = vld [vmem:[#allocation7 + $0x38] sm:$0xff]
        %v413 = vld [vmem:[#allocation7 + $0x40] sm:$0xff]
        %v414 = vld [vmem:[#allocation7 + $0x48] sm:$0xff]
        %v415 = vld [vmem:[#allocation7 + $0x50] sm:$0xff]
        %v416 = vld [vmem:[#allocation7 + $0x58] sm:$0xff]
        %v417 = vld [vmem:[#allocation7 + $0x60] sm:$0xff]
        %v418 = vld [vmem:[#allocation7 + $0x68] sm:$0xff]
        %v419 = vld [vmem:[#allocation7 + $0x70] sm:$0xff]
        %v420 = vld [vmem:[#allocation7 + $0x78] sm:$0xff]
        %v421 = vld [vmem:[%s303] sm:$0x1]
        %v423 = vlaneseq
        %v424 = vshrl.u32 %v423, 7
        %v425 = vsub.s32 0, %v424
        %v426 = vrot.slane %v421, %v425
        %428 = vmatprep.subr.mxu0 0.0
        %429 = vmatpush1.msra.mxu0 %v420
        %430 = vmatprep.subr.mxu0 0.0
        %431 = vmatpush1.msra.mxu0 %v419
        %432 = vmatprep.subr.mxu0 0.0
        %433 = vmatpush1.msra.mxu0 %v418
        %434 = vmatprep.subr.mxu0 0.0
        %435 = vmatpush1.msra.mxu0 %v417
        %436 = vmatprep.subr.mxu0 0.0
        %437 = vmatpush1.msra.mxu0 %v416
        %438 = vmatprep.subr.mxu0 0.0
        %439 = vmatpush1.msra.mxu0 %v415
        %440 = vmatprep.subr.mxu0 0.0
        %441 = vmatpush1.msra.mxu0 %v414
        %442 = vmatprep.subr.mxu0 0.0
        %443 = vmatpush1.msra.mxu0 %v413
        %444 = vmatprep.subr.mxu0 0.0
        %445 = vmatpush1.msra.mxu0 %v412
        %446 = vmatprep.subr.mxu0 0.0
        %447 = vmatpush1.msra.mxu0 %v411
        %448 = vmatprep.subr.mxu0 0.0
        %449 = vmatpush1.msra.mxu0 %v410
        %450 = vmatprep.subr.mxu0 0.0
        %451 = vmatpush1.msra.mxu0 %v409
        %452 = vmatprep.subr.mxu0 0.0
        %453 = vmatpush1.msra.mxu0 %v408
        %454 = vmatprep.subr.mxu0 0.0
        %455 = vmatpush1.msra.mxu0 %v407
        %456 = vmatprep.subr.mxu0 0.0
        %457 = vmatpush1.msra.mxu0 %v406
        %458 = vmatprep.subr.mxu0 0.0
        %459 = vmatpush1.msra.mxu0 %v405
        %460 = vmatprep.subr.mxu0 0.0
        %461 = vmatpush2.msra.mxu0 0.0
        %462 = vmatprep.subr.mxu0 0.0
        %463 = vmatpush2.msra.mxu0 0.0
        %464 = vmatprep.subr.mxu0 0.0
        %465 = vmatpush2.msra.mxu0 0.0
        %466 = vmatprep.subr.mxu0 0.0
        %467 = vmatpush2.msra.mxu0 0.0
        %468 = vmatprep.subr.mxu0 0.0
        %469 = vmatpush2.msra.mxu0 0.0
        %470 = vmatprep.subr.mxu0 0.0
        %471 = vmatpush2.msra.mxu0 0.0
        %472 = vmatprep.subr.mxu0 0.0
        %473 = vmatpush2.msra.mxu0 0.0
        %474 = vmatprep.subr.mxu0 0.0
        %475 = vmatpush2.msra.mxu0 0.0
        %476 = vmatprep.subr.mxu0 0.0
        %477 = vmatpush2.msra.mxu0 0.0
        %478 = vmatprep.subr.mxu0 0.0
        %479 = vmatpush2.msra.mxu0 0.0
        %480 = vmatprep.subr.mxu0 0.0
        %481 = vmatpush2.msra.mxu0 0.0
        %482 = vmatprep.subr.mxu0 0.0
        %483 = vmatpush2.msra.mxu0 0.0
        %484 = vmatprep.subr.mxu0 0.0
        %485 = vmatpush2.msra.mxu0 0.0
        %486 = vmatprep.subr.mxu0 0.0
        %487 = vmatpush2.msra.mxu0 0.0
        %488 = vmatprep.subr.mxu0 0.0
        %489 = vmatpush2.msra.mxu0 0.0
        %490 = vmatprep.subr.mxu0 0.0
        %491 = vmatpush2.msra.mxu0 0.0
        %492 = vmatprep.mubr.f32.mxu0 0.0
        %493 = vmatmul.mubr.f32.gmra.mxu0 %v404
        %v494 = vpop.f32.mrf.mxu0
        %v495 = vadd.f32 %v426, %v494
        %v496 = vpop.f32.mrf.mxu0
        %497 = vdwg.mxu0
        %498 = vst [vmem:[%s300] sm:$0xff] %v495
        %s499 = sand.u32 %s165, 1
        %s500 = scalar_lea.sflag [#allocation4], %s499
        %s501 = sand.u32 %s165, 1
        %s502 = smul.addr %s501, 8
        %s503 = scalar_lea.vmem [#allocation8], %s502
        // Predicated region
        $region53: #{tpu_custom_call.1} parent=39 // pred_check
          %p504 = pneg %p175
        $region54: #{tpu_custom_call.1} parent=39 // pred_check_branch
          %506 = sbr.rel (%p504) target = $region56
        $region55: #{tpu_custom_call.1} parent=39 // pred_region
          %s508 = ssub.s32 128, 128
          %509 = vsyncadd %s500, %s508
          %s510 = sadd.s32 %s28, %s27
          %s511 = smul.addr %s510, 128
          %s512 = scalar_lea.hbm %s5, %s511
          %s514 = sshll.u32 %s503, 4
          %s515 = int_to_ptr.vmem [resolvable:$true] %s514
          %517 = dma.vmem_to_hbm [thread:$0]  %s515, 128, %s512, %s500
        $region56: #{tpu_custom_call.1} parent=39 // pred_fallthru
          _
      $region40: #{tpu_custom_call.1} parent=5 // pred_fallthru
        _
      %p518 = scmp.le.s32.totalorder 2, %s18
      // Predicated region
      $region57: #{tpu_custom_call.1} parent=5 // pred_check
        %p519 = pneg %p518
      $region58: #{tpu_custom_call.1} parent=5 // pred_check_branch
        %521 = sbr.rel (%p519) target = $region60
      $region59: #{tpu_custom_call.1} parent=5 // pred_region
        %s522 = ssub.s32 %s18, 2
        // Predicated region
        $region61: #{tpu_custom_call.1} parent=59 // pred_check
          %p523 = pneg %p181
        $region62: #{tpu_custom_call.1} parent=59 // pred_check_branch
          %525 = sbr.rel (%p523) target = $region64
        $region63: #{tpu_custom_call.1} parent=59 // pred_region
          %s526 = sand.u32 %s166, 1
          %s527 = scalar_lea.sflag [#allocation4], %s526
          %s528 = sand.u32 %s166, 1
          %s529 = smul.addr %s528, 8
          %s530 = scalar_lea.vmem [#allocation8], %s529
          %531 = dma.done %s527, 128
        $region64: #{tpu_custom_call.1} parent=59 // pred_fallthru
          _
      $region60: #{tpu_custom_call.1} parent=5 // pred_fallthru
        _
    $region6: #{tpu_custom_call.1} parent=1 // loop_footer
      %s22 = sadd.s32 1, %s18
    $region7: #{tpu_custom_call.1} parent=1 // loop_footer_branch
      %17 = sbr.rel target = $region3
    $region8: #{tpu_custom_call.1} parent=1 // loop_exit
      _
    %532 = vsyncpa [#allocation3], 1
    %s533 = scalar_lea.sflag [#allocation3], 1
    %534 = vsyncpa %s533, 1
    %535 = vsyncpa [#allocation6], 1
    %536 = vsyncpa [#allocation4], 1
    %s537 = scalar_lea.sflag [#allocation4], 1
    %538 = vsyncpa %s537, 1

</llo_original>
